<compile_context>
chip_gen: v6e
topology: v6e:2x2x1
jax: 0.10.0
libtpu: 0.0.40
codegen_flags: <defaults>
</compile_context>

<pallas_src>
import jax
import jax.numpy as jnp
from jax.experimental import pallas as pl
from jax.experimental.pallas import tpu as pltpu

# --- small, module-consistent sizes -----------------------------------------
NUM_INPUTS = 16
NUM_ACTIONS = 4
NUM_DISCRETE = 8
HIDDEN = 32
H2 = HIDDEN // 2
AD = NUM_ACTIONS * NUM_DISCRETE          # 32

NEG_SLOPE = 0.01                         # nn.LeakyReLU default

# packed "constants" layout: one (8, 128) f32 block, one constant per sublane row,
# each starting at lane 0 (zero-cost slices, exactly one vreg resident in VMEM).
_ROW_BC = 0        # common bias                    (HIDDEN,)
_ROW_BH = 1        # fused actor[0] | critic1 bias  (2*H2,)
_ROW_BA2 = 2       # actor[2] bias                  (AD,)
_ROW_BR = 3        # residual bias                  (H2,)
_ROW_WC2 = 4       # critic2 weight (as a row)      (H2,)
_ROW_BC2 = 5       # critic2 bias                   (1,)
VEC_ROWS, VEC_LANES = 8, 128

OUT_LANES = 128    # lane-dense packed output slab: [policy(32) | value(1) | zeros]
_VAL_COL = AD


def _leaky(x):
    return jnp.where(x > 0, x, NEG_SLOPE * x)


def _actor_critic_kernel(state_ref, wc_ref, wh_ref, wa2_ref, wr_ref,
                         mask_ref, vec_ref, out_ref):
    x = state_ref[...]                                    # (TB, NI)
    vec = vec_ref[...]                                    # (8, 128) -- one vreg
    tb = x.shape[0]

    bc = vec[_ROW_BC:_ROW_BC + 1, :HIDDEN]                # (1, 32)
    bh = vec[_ROW_BH:_ROW_BH + 1, :2 * H2]                # (1, 32)
    ba2 = vec[_ROW_BA2:_ROW_BA2 + 1, :AD]                 # (1, 32)
    br = vec[_ROW_BR:_ROW_BR + 1, :H2]                    # (1, 16)
    wc2_row = vec[_ROW_WC2:_ROW_WC2 + 1, :H2]             # (1, 16)
    bc2 = vec[_ROW_BC2:_ROW_BC2 + 1, :1]                  # (1, 1)

    # common = LeakyReLU(Linear(state))
    common = _leaky(
        jnp.dot(x, wc_ref[...], preferred_element_type=jnp.float32) + bc)

    # fused actor[0] | critic1 -> single MXU pass, static lane split
    fused = _leaky(
        jnp.dot(common, wh_ref[...], preferred_element_type=jnp.float32) + bh)
    h = fused[:, :H2]                                     # actor hidden
    critic1 = fused[:, H2:]                               # critic1 activation

    # actor logits
    logits = (jnp.dot(h, wa2_ref[...], preferred_element_type=jnp.float32)
              + ba2)                                      # (TB, AD)

    # exact grouped softmax over contiguous groups of NUM_DISCRETE:
    # subtract the *per-group* max (correctness fix vs. global row max), then use
    # the block-diagonal 0/1 mask on the otherwise-idle MXU to broadcast per-group
    # sums back to every column; normalize with an exact division.
    pieces = []
    for g in range(NUM_ACTIONS):
        seg = logits[:, g * NUM_DISCRETE:(g + 1) * NUM_DISCRETE]     # (TB, 8)
        gmax = jnp.max(seg, axis=1, keepdims=True)                   # (TB, 1)
        pieces.append(seg - gmax)
    e = jnp.exp(jnp.concatenate(pieces, axis=1))                     # (TB, AD)
    group_sums = jnp.dot(e, mask_ref[...],
                         preferred_element_type=jnp.float32)         # (TB, AD)
    policy = e / group_sums                                          # (TB, AD)

    # residual = LeakyReLU(Linear(policy.flatten()))
    residual = _leaky(
        jnp.dot(policy, wr_ref[...], preferred_element_type=jnp.float32) + br)

    # value = critic2(relu(critic1 + residual)) -- VPU multiply + lane reduce
    h2 = jnp.maximum(critic1 + residual, 0.0)                        # (TB, H2)
    value = jnp.sum(h2 * wc2_row, axis=-1, keepdims=True) + bc2      # (TB, 1)

    # single lane-dense (TB, 128) store: [policy | value | zero pad]
    pad = jnp.zeros((tb, OUT_LANES - AD - 1), jnp.float32)
    out_ref[...] = jnp.concatenate([policy, value, pad], axis=1)


# --- host-side wrappers ------------------------------------------------------
def pack_params(params):
    """Pack the 12 module parameters into
    (wc, w_fused, wa2, wr, group_mask, packed_consts)."""
    (wc, bc, wa1, ba1, wa2, ba2, wc1, bc1, wc2, bc2, wr, br) = params
    w_fused = jnp.concatenate([wa1, wc1], axis=1)         # (HIDDEN, 2*H2)

    vec = jnp.zeros((VEC_ROWS, VEC_LANES), jnp.float32)
    vec = vec.at[_ROW_BC, :HIDDEN].set(bc[0])
    vec = vec.at[_ROW_BH, :2 * H2].set(jnp.concatenate([ba1[0], bc1[0]]))
    vec = vec.at[_ROW_BA2, :AD].set(ba2[0])
    vec = vec.at[_ROW_BR, :H2].set(br[0])
    vec = vec.at[_ROW_WC2, :H2].set(wc2[:, 0])
    vec = vec.at[_ROW_BC2, 0].set(bc2[0, 0])

    ii = jnp.arange(AD)[:, None] // NUM_DISCRETE
    jj = jnp.arange(AD)[None, :] // NUM_DISCRETE
    group_mask = (ii == jj).astype(jnp.float32)           # (AD, AD) block-diagonal
    return (wc, w_fused, wa2, wr, group_mask, vec)


def _round_up(x, m):
    return (x + m - 1) // m * m


def _choose_tb(b):
    # Large blocks amortize the ~0.35 us/step overhead; targeting ~4 blocks keeps
    # both v7x TensorCores busy on big batches (no effect on v5e/v6e, 1 TC).
    # Cap at 1024 so the per-step working set stays well inside v5e's 16 MiB
    # scoped-VMEM default (v6e/v7x have even more headroom).
    return max(16, min(1024, _round_up((b + 3) // 4, 16)))


def forward_batched(states, packed, block_b=None):
    """states: (B, NUM_INPUTS) f32 -> (value (B,1), policy (B, A, D))."""
    wc, wh, wa2, wr, mask, vec = packed
    b = states.shape[0]
    tb = _choose_tb(b) if block_b is None else _round_up(max(block_b, 16), 16)
    b_pad = _round_up(b, tb)
    if b_pad != b:
        pad = jnp.zeros((b_pad - b, NUM_INPUTS), states.dtype)
        states = jnp.concatenate([states, pad], axis=0)

    out = pl.pallas_call(
        _actor_critic_kernel,
        out_shape=jax.ShapeDtypeStruct((b_pad, OUT_LANES), jnp.float32),
        grid=(b_pad // tb,),
        in_specs=[
            pl.BlockSpec((tb, NUM_INPUTS), lambda i: (i, 0)),
            pl.BlockSpec((NUM_INPUTS, HIDDEN), lambda i: (0, 0)),
            pl.BlockSpec((HIDDEN, 2 * H2), lambda i: (0, 0)),
            pl.BlockSpec((H2, AD), lambda i: (0, 0)),
            pl.BlockSpec((AD, H2), lambda i: (0, 0)),
            pl.BlockSpec((AD, AD), lambda i: (0, 0)),          # group mask (resident)
            pl.BlockSpec((VEC_ROWS, VEC_LANES), lambda i: (0, 0)),
        ],
        out_specs=pl.BlockSpec((tb, OUT_LANES), lambda i: (i, 0)),
        compiler_params=pltpu.CompilerParams(
            dimension_semantics=("parallel",)),   # shards batch blocks over v7x's 2 TCs
    )(states, wc, wh, wa2, wr, mask, vec)

    value = out[:b, _VAL_COL:_VAL_COL + 1]
    policy = out[:b, :AD].reshape(b, NUM_ACTIONS, NUM_DISCRETE)
    return value, policy


def split_discrete_actor_critic(state, packed):
    """Single-state forward matching the PyTorch module.

    state: (NUM_INPUTS,) or (1, NUM_INPUTS) f32.
    Returns (value (1,1), policy_dist (NUM_ACTIONS, NUM_DISCRETE))."""
    state = jnp.asarray(state, jnp.float32).reshape(1, NUM_INPUTS)
    value, policy = forward_batched(state, packed)
    return value, policy[0]


# --- reference + test ---------------------------------------------------------
def _init_params(key):
    # TODO(synk): utils.init_weights has no in-kernel equivalent; init is done
    # host-side with jax.random (forward-pass semantics are unaffected).
    ks = jax.random.split(key, 12)

    def w(k, shape):
        return jax.random.normal(k, shape, dtype=jnp.float32) * 0.1

    return (
        w(ks[0], (NUM_INPUTS, HIDDEN)),  w(ks[1], (1, HIDDEN)),      # common
        w(ks[2], (HIDDEN, H2)),          w(ks[3], (1, H2)),          # actor[0]
        w(ks[4], (H2, AD)),              w(ks[5], (1, AD)),          # actor[2]
        w(ks[6], (HIDDEN, H2)),          w(ks[7], (1, H2)),          # critic1
        w(ks[8], (H2, 1)),               w(ks[9], (1, 1)),           # critic2
        w(ks[10], (AD, H2)),             w(ks[11], (1, H2)),         # residual
    )


def _reference(states, params):
    (wc, bc, wa1, ba1, wa2, ba2, wc1, bc1, wc2, bc2, wr, br) = params
    common = _leaky(states @ wc + bc)
    logits = (_leaky(common @ wa1 + ba1) @ wa2 + ba2)
    policy = jax.nn.softmax(logits.reshape(-1, NUM_ACTIONS, NUM_DISCRETE), axis=-1)
    critic1 = _leaky(common @ wc1 + bc1)
    residual = _leaky(policy.reshape(-1, AD) @ wr + br)
    value = jnp.maximum(critic1 + residual, 0.0) @ wc2 + bc2
    return value, policy


if __name__ == "__main__":
    key = jax.random.PRNGKey(0)
    pkey, skey, bkey, ckey = jax.random.split(key, 4)
    params = _init_params(pkey)
    packed = pack_params(params)

    # single-state path (the PyTorch module's forward semantics)
    state = jax.random.normal(skey, (NUM_INPUTS,), dtype=jnp.float32)
    value, policy = split_discrete_actor_critic(state, packed)
    jax.block_until_ready((value, policy))
    ref_value, ref_policy = _reference(state.reshape(1, NUM_INPUTS), params)
    assert value.shape == (1, 1) and policy.shape == (NUM_ACTIONS, NUM_DISCRETE)
    assert jnp.allclose(value, ref_value, rtol=1e-5, atol=1e-5)
    assert jnp.allclose(policy, ref_policy[0], rtol=1e-5, atol=1e-5)

    # batched path, auto tiling: B=19 -> tb=16, padded to 32, 2 parallel blocks
    states = jax.random.normal(bkey, (19, NUM_INPUTS), dtype=jnp.float32)
    bval, bpol = forward_batched(states, packed)
    jax.block_until_ready((bval, bpol))
    rval, rpol = _reference(states, params)
    assert bval.shape == (19, 1) and bpol.shape == (19, NUM_ACTIONS, NUM_DISCRETE)
    assert jnp.allclose(bval, rval, rtol=1e-5, atol=1e-5)
    assert jnp.allclose(bpol, rpol, rtol=1e-5, atol=1e-5)

    # batched path, explicit block: B=200 with block_b=64 -> padded to 256, 4 blocks
    states2 = jax.random.normal(ckey, (200, NUM_INPUTS), dtype=jnp.float32)
    bval2, bpol2 = forward_batched(states2, packed, block_b=64)
    jax.block_until_ready((bval2, bpol2))
    rval2, rpol2 = _reference(states2, params)
    assert bval2.shape == (200, 1) and bpol2.shape == (200, NUM_ACTIONS, NUM_DISCRETE)
    assert jnp.allclose(bval2, rval2, rtol=1e-5, atol=1e-5)
    assert jnp.allclose(bpol2, rpol2, rtol=1e-5, atol=1e-5)

    print("KERNEL_OK")
</pallas_src>

<mosaic_0001>
module attributes {stable_mosaic.version = 11 : i64} {
  func.func @_actor_critic_kernel(%arg0: i32, %arg1: memref<16x16xf32, #tpu.memory_space<vmem>>, %arg2: memref<16x32xf32, #tpu.memory_space<vmem>>, %arg3: memref<32x32xf32, #tpu.memory_space<vmem>>, %arg4: memref<16x32xf32, #tpu.memory_space<vmem>>, %arg5: memref<32x16xf32, #tpu.memory_space<vmem>>, %arg6: memref<32x32xf32, #tpu.memory_space<vmem>>, %arg7: memref<8x128xf32, #tpu.memory_space<vmem>>, %arg8: memref<16x128xf32, #tpu.memory_space<vmem>>) attributes {dimension_semantics = [#tpu.dimension_semantics<parallel>], iteration_bounds = array<i64: 1>, scalar_prefetch = 0 : i64, scratch_operands = 0 : i64, tpu.core_type = #tpu.core_type<tc>, window_params = [{transform_indices = @transform_0, window_bounds = array<i64: 16, 16>}, {pipeline_mode = #tpu.pipeline_mode<synchronous>, transform_indices = @transform_1, window_bounds = array<i64: 16, 32>}, {pipeline_mode = #tpu.pipeline_mode<synchronous>, transform_indices = @transform_2, window_bounds = array<i64: 32, 32>}, {pipeline_mode = #tpu.pipeline_mode<synchronous>, transform_indices = @transform_3, window_bounds = array<i64: 16, 32>}, {pipeline_mode = #tpu.pipeline_mode<synchronous>, transform_indices = @transform_4, window_bounds = array<i64: 32, 16>}, {pipeline_mode = #tpu.pipeline_mode<synchronous>, transform_indices = @transform_5, window_bounds = array<i64: 32, 32>}, {pipeline_mode = #tpu.pipeline_mode<synchronous>, transform_indices = @transform_6, window_bounds = array<i64: 8, 128>}, {transform_indices = @transform_7, window_bounds = array<i64: 16, 128>}]} {
    %c0 = arith.constant 0 : index
    %c0_0 = arith.constant 0 : index
    %0 = vector.load %arg1[%c0, %c0_0] : memref<16x16xf32, #tpu.memory_space<vmem>>, vector<16x16xf32>
    %c0_1 = arith.constant 0 : index
    %c0_2 = arith.constant 0 : index
    %1 = vector.load %arg7[%c0_1, %c0_2] : memref<8x128xf32, #tpu.memory_space<vmem>>, vector<8x128xf32>
    %2 = vector.extract_strided_slice %1 {offsets = [0, 0], sizes = [1, 32], strides = [1, 1]} : vector<8x128xf32> to vector<1x32xf32>
    %3 = vector.extract_strided_slice %1 {offsets = [1, 0], sizes = [1, 32], strides = [1, 1]} : vector<8x128xf32> to vector<1x32xf32>
    %4 = vector.extract_strided_slice %1 {offsets = [2, 0], sizes = [1, 32], strides = [1, 1]} : vector<8x128xf32> to vector<1x32xf32>
    %5 = vector.extract_strided_slice %1 {offsets = [3, 0], sizes = [1, 16], strides = [1, 1]} : vector<8x128xf32> to vector<1x16xf32>
    %6 = vector.extract_strided_slice %1 {offsets = [4, 0], sizes = [1, 16], strides = [1, 1]} : vector<8x128xf32> to vector<1x16xf32>
    %7 = vector.extract_strided_slice %1 {offsets = [5, 0], sizes = [1, 1], strides = [1, 1]} : vector<8x128xf32> to vector<1x1xf32>
    %c0_3 = arith.constant 0 : index
    %c0_4 = arith.constant 0 : index
    %8 = vector.load %arg2[%c0_3, %c0_4] : memref<16x32xf32, #tpu.memory_space<vmem>>, vector<16x32xf32>
    %cst = arith.constant dense<0.000000e+00> : vector<16x32xf32>
    %9 = tpu.matmul %0, %8, %cst {dimension_numbers = #tpu.dot_dimension_numbers<[1], [0], [0], [1], [0, 0, 1, 1], [], []>} : vector<16x16xf32>, vector<16x32xf32>, vector<16x32xf32> -> vector<16x32xf32>
    %10 = vector.broadcast %2 : vector<1x32xf32> to vector<16x32xf32>
    %11 = arith.addf %9, %10 : vector<16x32xf32>
    %cst_5 = arith.constant 0.000000e+00 : f32
    %12 = vector.broadcast %cst_5 : f32 to vector<16x32xf32>
    %13 = arith.cmpf ogt, %11, %12 : vector<16x32xf32>
    %cst_6 = arith.constant 0.00999999977 : f32
    %14 = vector.broadcast %cst_6 : f32 to vector<16x32xf32>
    %15 = arith.mulf %14, %11 : vector<16x32xf32>
    %16 = arith.select %13, %11, %15 : vector<16x32xi1>, vector<16x32xf32>
    %c0_7 = arith.constant 0 : index
    %c0_8 = arith.constant 0 : index
    %17 = vector.load %arg3[%c0_7, %c0_8] : memref<32x32xf32, #tpu.memory_space<vmem>>, vector<32x32xf32>
    %cst_9 = arith.constant dense<0.000000e+00> : vector<16x32xf32>
    %18 = tpu.matmul %16, %17, %cst_9 {dimension_numbers = #tpu.dot_dimension_numbers<[1], [0], [0], [1], [0, 0, 1, 1], [], []>} : vector<16x32xf32>, vector<32x32xf32>, vector<16x32xf32> -> vector<16x32xf32>
    %19 = vector.broadcast %3 : vector<1x32xf32> to vector<16x32xf32>
    %20 = arith.addf %18, %19 : vector<16x32xf32>
    %cst_10 = arith.constant 0.000000e+00 : f32
    %21 = vector.broadcast %cst_10 : f32 to vector<16x32xf32>
    %22 = arith.cmpf ogt, %20, %21 : vector<16x32xf32>
    %cst_11 = arith.constant 0.00999999977 : f32
    %23 = vector.broadcast %cst_11 : f32 to vector<16x32xf32>
    %24 = arith.mulf %23, %20 : vector<16x32xf32>
    %25 = arith.select %22, %20, %24 : vector<16x32xi1>, vector<16x32xf32>
    %26 = vector.extract_strided_slice %25 {offsets = [0, 0], sizes = [16, 16], strides = [1, 1]} : vector<16x32xf32> to vector<16x16xf32>
    %27 = vector.extract_strided_slice %25 {offsets = [0, 16], sizes = [16, 16], strides = [1, 1]} : vector<16x32xf32> to vector<16x16xf32>
    %c0_12 = arith.constant 0 : index
    %c0_13 = arith.constant 0 : index
    %28 = vector.load %arg4[%c0_12, %c0_13] : memref<16x32xf32, #tpu.memory_space<vmem>>, vector<16x32xf32>
    %cst_14 = arith.constant dense<0.000000e+00> : vector<16x32xf32>
    %29 = tpu.matmul %26, %28, %cst_14 {dimension_numbers = #tpu.dot_dimension_numbers<[1], [0], [0], [1], [0, 0, 1, 1], [], []>} : vector<16x16xf32>, vector<16x32xf32>, vector<16x32xf32> -> vector<16x32xf32>
    %30 = vector.broadcast %4 : vector<1x32xf32> to vector<16x32xf32>
    %31 = arith.addf %29, %30 : vector<16x32xf32>
    %32 = vector.extract_strided_slice %31 {offsets = [0, 0], sizes = [16, 8], strides = [1, 1]} : vector<16x32xf32> to vector<16x8xf32>
    %cst_15 = arith.constant dense<0xFF800000> : vector<16xf32>
    %33 = vector.multi_reduction <maximumf>, %32, %cst_15 [1] : vector<16x8xf32> to vector<16xf32>
    %34 = vector.shape_cast %33 : vector<16xf32> to vector<16x1xf32>
    %35 = vector.broadcast %34 : vector<16x1xf32> to vector<16x8xf32>
    %36 = arith.subf %32, %35 : vector<16x8xf32>
    %37 = vector.extract_strided_slice %31 {offsets = [0, 8], sizes = [16, 8], strides = [1, 1]} : vector<16x32xf32> to vector<16x8xf32>
    %cst_16 = arith.constant dense<0xFF800000> : vector<16xf32>
    %38 = vector.multi_reduction <maximumf>, %37, %cst_16 [1] : vector<16x8xf32> to vector<16xf32>
    %39 = vector.shape_cast %38 : vector<16xf32> to vector<16x1xf32>
    %40 = vector.broadcast %39 : vector<16x1xf32> to vector<16x8xf32>
    %41 = arith.subf %37, %40 : vector<16x8xf32>
    %42 = vector.extract_strided_slice %31 {offsets = [0, 16], sizes = [16, 8], strides = [1, 1]} : vector<16x32xf32> to vector<16x8xf32>
    %cst_17 = arith.constant dense<0xFF800000> : vector<16xf32>
    %43 = vector.multi_reduction <maximumf>, %42, %cst_17 [1] : vector<16x8xf32> to vector<16xf32>
    %44 = vector.shape_cast %43 : vector<16xf32> to vector<16x1xf32>
    %45 = vector.broadcast %44 : vector<16x1xf32> to vector<16x8xf32>
    %46 = arith.subf %42, %45 : vector<16x8xf32>
    %47 = vector.extract_strided_slice %31 {offsets = [0, 24], sizes = [16, 8], strides = [1, 1]} : vector<16x32xf32> to vector<16x8xf32>
    %cst_18 = arith.constant dense<0xFF800000> : vector<16xf32>
    %48 = vector.multi_reduction <maximumf>, %47, %cst_18 [1] : vector<16x8xf32> to vector<16xf32>
    %49 = vector.shape_cast %48 : vector<16xf32> to vector<16x1xf32>
    %50 = vector.broadcast %49 : vector<16x1xf32> to vector<16x8xf32>
    %51 = arith.subf %47, %50 : vector<16x8xf32>
    %52 = tpu.concatenate %36, %41, %46, %51 in 1 : vector<16x8xf32>, vector<16x8xf32>, vector<16x8xf32>, vector<16x8xf32> -> vector<16x32xf32>
    %53 = math.exp %52 : vector<16x32xf32>
    %c0_19 = arith.constant 0 : index
    %c0_20 = arith.constant 0 : index
    %54 = vector.load %arg6[%c0_19, %c0_20] : memref<32x32xf32, #tpu.memory_space<vmem>>, vector<32x32xf32>
    %cst_21 = arith.constant dense<0.000000e+00> : vector<16x32xf32>
    %55 = tpu.matmul %53, %54, %cst_21 {dimension_numbers = #tpu.dot_dimension_numbers<[1], [0], [0], [1], [0, 0, 1, 1], [], []>} : vector<16x32xf32>, vector<32x32xf32>, vector<16x32xf32> -> vector<16x32xf32>
    %56 = arith.divf %53, %55 : vector<16x32xf32>
    %c0_22 = arith.constant 0 : index
    %c0_23 = arith.constant 0 : index
    %57 = vector.load %arg5[%c0_22, %c0_23] : memref<32x16xf32, #tpu.memory_space<vmem>>, vector<32x16xf32>
    %cst_24 = arith.constant dense<0.000000e+00> : vector<16x16xf32>
    %58 = tpu.matmul %56, %57, %cst_24 {dimension_numbers = #tpu.dot_dimension_numbers<[1], [0], [0], [1], [0, 0, 1, 1], [], []>} : vector<16x32xf32>, vector<32x16xf32>, vector<16x16xf32> -> vector<16x16xf32>
    %59 = vector.broadcast %5 : vector<1x16xf32> to vector<16x16xf32>
    %60 = arith.addf %58, %59 : vector<16x16xf32>
    %cst_25 = arith.constant 0.000000e+00 : f32
    %61 = vector.broadcast %cst_25 : f32 to vector<16x16xf32>
    %62 = arith.cmpf ogt, %60, %61 : vector<16x16xf32>
    %cst_26 = arith.constant 0.00999999977 : f32
    %63 = vector.broadcast %cst_26 : f32 to vector<16x16xf32>
    %64 = arith.mulf %63, %60 : vector<16x16xf32>
    %65 = arith.select %62, %60, %64 : vector<16x16xi1>, vector<16x16xf32>
    %66 = arith.addf %27, %65 : vector<16x16xf32>
    %cst_27 = arith.constant 0.000000e+00 : f32
    %67 = vector.broadcast %cst_27 : f32 to vector<16x16xf32>
    %68 = arith.maximumf %66, %67 : vector<16x16xf32>
    %69 = vector.broadcast %6 : vector<1x16xf32> to vector<16x16xf32>
    %70 = arith.mulf %68, %69 : vector<16x16xf32>
    %cst_28 = arith.constant dense<0.000000e+00> : vector<16xf32>
    %71 = vector.multi_reduction <add>, %70, %cst_28 [1] : vector<16x16xf32> to vector<16xf32>
    %72 = vector.shape_cast %71 : vector<16xf32> to vector<16x1xf32>
    %73 = vector.broadcast %7 : vector<1x1xf32> to vector<16x1xf32>
    %74 = arith.addf %72, %73 : vector<16x1xf32>
    %cst_29 = arith.constant 0.000000e+00 : f32
    %75 = vector.broadcast %cst_29 : f32 to vector<16x95xf32>
    %76 = tpu.concatenate %56, %74, %75 in 1 : vector<16x32xf32>, vector<16x1xf32>, vector<16x95xf32> -> vector<16x128xf32>
    %c0_30 = arith.constant 0 : index
    %c0_31 = arith.constant 0 : index
    %77 = vector.load %arg8[%c0_30, %c0_31] : memref<16x128xf32, #tpu.memory_space<vmem>>, vector<16x128xf32>
    tpu.vector_store %arg8[%c0_30, %c0_31], %76 {strides = array<i32>} : memref<16x128xf32, #tpu.memory_space<vmem>>, vector<16x128xf32>,
    return
  }
  func.func @transform_0(%arg0: i32) -> (i32, i32) {
    %c0_i32 = arith.constant 0 : i32
    %c0_i32_0 = arith.constant 0 : i32
    return %arg0, %c0_i32 : i32, i32
  }
  func.func @transform_1(%arg0: i32) -> (i32, i32) {
    %c0_i32 = arith.constant 0 : i32
    %c0_i32_0 = arith.constant 0 : i32
    %c0_i32_1 = arith.constant 0 : i32
    return %c0_i32, %c0_i32_0 : i32, i32
  }
  func.func @transform_2(%arg0: i32) -> (i32, i32) {
    %c0_i32 = arith.constant 0 : i32
    %c0_i32_0 = arith.constant 0 : i32
    %c0_i32_1 = arith.constant 0 : i32
    return %c0_i32, %c0_i32_0 : i32, i32
  }
  func.func @transform_3(%arg0: i32) -> (i32, i32) {
    %c0_i32 = arith.constant 0 : i32
    %c0_i32_0 = arith.constant 0 : i32
    %c0_i32_1 = arith.constant 0 : i32
    return %c0_i32, %c0_i32_0 : i32, i32
  }
  func.func @transform_4(%arg0: i32) -> (i32, i32) {
    %c0_i32 = arith.constant 0 : i32
    %c0_i32_0 = arith.constant 0 : i32
    %c0_i32_1 = arith.constant 0 : i32
    return %c0_i32, %c0_i32_0 : i32, i32
  }
  func.func @transform_5(%arg0: i32) -> (i32, i32) {
    %c0_i32 = arith.constant 0 : i32
    %c0_i32_0 = arith.constant 0 : i32
    %c0_i32_1 = arith.constant 0 : i32
    return %c0_i32, %c0_i32_0 : i32, i32
  }
  func.func @transform_6(%arg0: i32) -> (i32, i32) {
    %c0_i32 = arith.constant 0 : i32
    %c0_i32_0 = arith.constant 0 : i32
    %c0_i32_1 = arith.constant 0 : i32
    return %c0_i32, %c0_i32_0 : i32, i32
  }
  func.func @transform_7(%arg0: i32) -> (i32, i32) {
    %c0_i32 = arith.constant 0 : i32
    %c0_i32_0 = arith.constant 0 : i32
    return %arg0, %c0_i32 : i32, i32
  }
}

</mosaic_0001>

<llo_original>
// kernel: tpu_custom_call.1
$region0: #{tpu_custom_call.1}
  #allocation0 [shape = 'u32[]', space=smem, size = 0x4, offset = 0x4, fixed_abs, tag = 'smem constant byte address 0x4 - core index']
  #allocation1 [shape = 'u32[144,128]{1,0:T(1,128)}', space=vmem, size = 0x12000, scoped, tag = 'internal scratch']
  %s0 = inlined_call_operand.vmem [shape: f32[16,16], index: 0, kind: input, shape index: {}]
  %s1 = inlined_call_operand.hbm [shape: f32[16,32], index: 1, kind: input, shape index: {}]
  %s2 = inlined_call_operand.vmem [shape: f32[32,32], index: 2, kind: input, shape index: {}]
  %s3 = inlined_call_operand.hbm [shape: f32[16,32], index: 3, kind: input, shape index: {}]
  %s4 = inlined_call_operand.vmem [shape: f32[32,16], index: 4, kind: input, shape index: {}]
  %s5 = inlined_call_operand.hbm [shape: f32[32,32], index: 5, kind: input, shape index: {}]
  %s6 = inlined_call_operand.vmem [shape: f32[8,128], index: 6, kind: input, shape index: {}]
  %s7 = inlined_call_operand.hbm [shape: f32[16,128], index: 7, kind: output, shape index: {}]
  %s8 = sld [smem:[#allocation0]]
  $region50: #{tpu_custom_call.1} parent=0
    _
  %s10 = ssub.s32 1, %s8
  %s11 = scalar_select 0, %s10, %s8
  $region1: #{tpu_custom_call.1} parent=0
    #allocation2 [shape = 'u8[8192]{0}', space=vmem, size = 0x2000, scoped, tag = 'input window, operand 1, single buffered']
    #allocation3 [shape = 's32[1]{0}', space=sflag, size = 0x4, scoped, tag = 'scoped memory for tpu_custom_call.1']
    #allocation4 [shape = 's32[1]{0}', space=sflag, size = 0x4, scoped, tag = 'scoped memory for tpu_custom_call.1']
    #allocation5 [shape = 'u8[8192]{0}', space=vmem, size = 0x2000, scoped, tag = 'input window, operand 3, single buffered']
    #allocation6 [shape = 's32[1]{0}', space=sflag, size = 0x4, scoped, tag = 'scoped memory for tpu_custom_call.1']
    #allocation7 [shape = 'u8[16384]{0}', space=vmem, size = 0x4000, scoped, tag = 'input window, operand 5, single buffered']
    #allocation8 [shape = 'u8[8192]{0}', space=vmem, size = 0x2000, scoped, tag = 'output window, operand 0, single buffered']
    %12 = vsyncpa [#allocation3], 0
    %13 = vsyncpa [#allocation6], 0
    %14 = vsyncpa [#allocation4], 0
    // Predicated region
    $region2: #{tpu_custom_call.1} parent=1 // pred_check
      _
    $region3: #{tpu_custom_call.1} parent=1 // pred_check_branch
      %16 = sbr.rel (0) target = $region5
    $region4: #{tpu_custom_call.1} parent=1 // pred_region
      _
    $region5: #{tpu_custom_call.1} parent=1 // pred_fallthru
      _
    // Predicated region
    $region6: #{tpu_custom_call.1} parent=1 // pred_check
      _
    $region7: #{tpu_custom_call.1} parent=1 // pred_check_branch
      %18 = sbr.rel (0) target = $region9
    $region8: #{tpu_custom_call.1} parent=1 // pred_region
      %s20 = ssub.s32 256, 256
      %21 = vsyncadd [#allocation3], %s20
      %s22 = sshll.u32 [#allocation2], 4
      %s23 = int_to_ptr.vmem [resolvable:$true] %s22
      %28 = dma.hbm_to_vmem [thread:$0]  %s1, 256, %s23, [#allocation3], 128, 128, 8
    $region9: #{tpu_custom_call.1} parent=1 // pred_fallthru
      _
    // Predicated region
    $region10: #{tpu_custom_call.1} parent=1 // pred_check
      _
    $region11: #{tpu_custom_call.1} parent=1 // pred_check_branch
      %30 = sbr.rel (0) target = $region13
    $region12: #{tpu_custom_call.1} parent=1 // pred_region
      _
    $region13: #{tpu_custom_call.1} parent=1 // pred_fallthru
      _
    // Predicated region
    $region14: #{tpu_custom_call.1} parent=1 // pred_check
      _
    $region15: #{tpu_custom_call.1} parent=1 // pred_check_branch
      %32 = sbr.rel (0) target = $region17
    $region16: #{tpu_custom_call.1} parent=1 // pred_region
      %s34 = ssub.s32 256, 256
      %35 = vsyncadd [#allocation6], %s34
      %s36 = sshll.u32 [#allocation5], 4
      %s37 = int_to_ptr.vmem [resolvable:$true] %s36
      %42 = dma.hbm_to_vmem [thread:$0]  %s3, 256, %s37, [#allocation6], 128, 128, 8
    $region17: #{tpu_custom_call.1} parent=1 // pred_fallthru
      _
    // Predicated region
    $region18: #{tpu_custom_call.1} parent=1 // pred_check
      _
    $region19: #{tpu_custom_call.1} parent=1 // pred_check_branch
      %44 = sbr.rel (0) target = $region21
    $region20: #{tpu_custom_call.1} parent=1 // pred_region
      _
    $region21: #{tpu_custom_call.1} parent=1 // pred_fallthru
      _
    // Predicated region
    $region22: #{tpu_custom_call.1} parent=1 // pred_check
      _
    $region23: #{tpu_custom_call.1} parent=1 // pred_check_branch
      %46 = sbr.rel (0) target = $region25
    $region24: #{tpu_custom_call.1} parent=1 // pred_region
      %s48 = ssub.s32 512, 512
      %49 = vsyncadd [#allocation6], %s48
      %s50 = sshll.u32 [#allocation7], 4
      %s51 = int_to_ptr.vmem [resolvable:$true] %s50
      %56 = dma.hbm_to_vmem [thread:$0]  %s5, 512, %s51, [#allocation6], 128, 128, 8
    $region25: #{tpu_custom_call.1} parent=1 // pred_fallthru
      _
    // Predicated region
    $region26: #{tpu_custom_call.1} parent=1 // pred_check
      _
    $region27: #{tpu_custom_call.1} parent=1 // pred_check_branch
      %58 = sbr.rel (0) target = $region29
    $region28: #{tpu_custom_call.1} parent=1 // pred_region
      _
    $region29: #{tpu_custom_call.1} parent=1 // pred_fallthru
      _
    // Predicated region
    $region30: #{tpu_custom_call.1} parent=1 // pred_check
      _
    $region31: #{tpu_custom_call.1} parent=1 // pred_check_branch
      %60 = sbr.rel (0) target = $region33
    $region32: #{tpu_custom_call.1} parent=1 // pred_region
      %61 = dma.done [#allocation3], 256
    $region33: #{tpu_custom_call.1} parent=1 // pred_fallthru
      _
    // Predicated region
    $region34: #{tpu_custom_call.1} parent=1 // pred_check
      _
    $region35: #{tpu_custom_call.1} parent=1 // pred_check_branch
      %63 = sbr.rel (0) target = $region37
    $region36: #{tpu_custom_call.1} parent=1 // pred_region
      %64 = dma.done [#allocation6], 256
    $region37: #{tpu_custom_call.1} parent=1 // pred_fallthru
      _
    // Predicated region
    $region38: #{tpu_custom_call.1} parent=1 // pred_check
      _
    $region39: #{tpu_custom_call.1} parent=1 // pred_check_branch
      %66 = sbr.rel (0) target = $region41
    $region40: #{tpu_custom_call.1} parent=1 // pred_region
      %67 = dma.done [#allocation6], 512
    $region41: #{tpu_custom_call.1} parent=1 // pred_fallthru
      _
    %v68 = vld [vmem:[%s0] sm:$0xff]
    %v69 = vld [vmem:[%s0 + $0x8] sm:$0xff]
    %v70 = vld [vmem:[%s6] sm:$0xff]
    %v71 = vld [vmem:[#allocation2] sm:$0xff]
    %v72 = vld [vmem:[#allocation2 + $0x8] sm:$0xff]
    %v73 = vlaneseq
    %v74 = vshrl.u32 %v73, 7
    %v75 = vsub.s32 0, %v74
    %v76 = vrot.slane %v70, %v75
    %vm77 = vcmask 130048
    %v79 = vsel %vm77, %v68, 0
    %v82 = vsel %vm77, %v69, 0
    %84 = vmatprep.subr.mxu0 0.0
    %85 = vmatpush1.msra.mxu0 0.0
    %86 = vmatprep.subr.mxu0 0.0
    %87 = vmatpush1.msra.mxu0 0.0
    %88 = vmatprep.subr.mxu0 0.0
    %89 = vmatpush1.msra.mxu0 0.0
    %90 = vmatprep.subr.mxu0 0.0
    %91 = vmatpush1.msra.mxu0 0.0
    %92 = vmatprep.subr.mxu0 0.0
    %93 = vmatpush1.msra.mxu0 0.0
    %94 = vmatprep.subr.mxu0 0.0
    %95 = vmatpush1.msra.mxu0 0.0
    %96 = vmatprep.subr.mxu0 0.0
    %97 = vmatpush1.msra.mxu0 0.0
    %98 = vmatprep.subr.mxu0 0.0
    %99 = vmatpush1.msra.mxu0 0.0
    %100 = vmatprep.subr.mxu0 0.0
    %101 = vmatpush1.msra.mxu0 0.0
    %102 = vmatprep.subr.mxu0 0.0
    %103 = vmatpush1.msra.mxu0 0.0
    %104 = vmatprep.subr.mxu0 0.0
    %105 = vmatpush1.msra.mxu0 0.0
    %106 = vmatprep.subr.mxu0 0.0
    %107 = vmatpush1.msra.mxu0 0.0
    %108 = vmatprep.subr.mxu0 0.0
    %109 = vmatpush1.msra.mxu0 0.0
    %110 = vmatprep.subr.mxu0 0.0
    %111 = vmatpush1.msra.mxu0 0.0
    %112 = vmatprep.subr.mxu0 0.0
    %113 = vmatpush1.msra.mxu0 %v72
    %114 = vmatprep.subr.mxu0 0.0
    %115 = vmatpush1.msra.mxu0 %v71
    %116 = vmatprep.subr.mxu0 0.0
    %117 = vmatpush2.msra.mxu0 0.0
    %118 = vmatprep.subr.mxu0 0.0
    %119 = vmatpush2.msra.mxu0 0.0
    %120 = vmatprep.subr.mxu0 0.0
    %121 = vmatpush2.msra.mxu0 0.0
    %122 = vmatprep.subr.mxu0 0.0
    %123 = vmatpush2.msra.mxu0 0.0
    %124 = vmatprep.subr.mxu0 0.0
    %125 = vmatpush2.msra.mxu0 0.0
    %126 = vmatprep.subr.mxu0 0.0
    %127 = vmatpush2.msra.mxu0 0.0
    %128 = vmatprep.subr.mxu0 0.0
    %129 = vmatpush2.msra.mxu0 0.0
    %130 = vmatprep.subr.mxu0 0.0
    %131 = vmatpush2.msra.mxu0 0.0
    %132 = vmatprep.subr.mxu0 0.0
    %133 = vmatpush2.msra.mxu0 0.0
    %134 = vmatprep.subr.mxu0 0.0
    %135 = vmatpush2.msra.mxu0 0.0
    %136 = vmatprep.subr.mxu0 0.0
    %137 = vmatpush2.msra.mxu0 0.0
    %138 = vmatprep.subr.mxu0 0.0
    %139 = vmatpush2.msra.mxu0 0.0
    %140 = vmatprep.subr.mxu0 0.0
    %141 = vmatpush2.msra.mxu0 0.0
    %142 = vmatprep.subr.mxu0 0.0
    %143 = vmatpush2.msra.mxu0 0.0
    %144 = vmatprep.subr.mxu0 0.0
    %145 = vmatpush2.msra.mxu0 0.0
    %146 = vmatprep.subr.mxu0 0.0
    %147 = vmatpush2.msra.mxu0 0.0
    %148 = vmatprep.mubr.f32.mxu0 0.0
    %149 = vmatmul.mubr.f32.gmra.mxu0 %v79
    %v150 = vpop.f32.mrf.mxu0
    %v151 = vadd.f32 %v76, %v150
    %v152 = vpop.f32.mrf.mxu0
    %153 = vmatprep.mubr.f32.mxu0 0.0
    %154 = vmatmul.mubr.f32.gmra.mxu0 %v82
    %v155 = vpop.f32.mrf.mxu0
    %v156 = vadd.f32 %v76, %v155
    %v157 = vpop.f32.mrf.mxu0
    %158 = vdwg.mxu0
    %vm159 = vcmp.gt.f32.partialorder %v151, 0.0
    %vm160 = vcmp.gt.f32.partialorder %v156, 0.0
    %v161 = vmul.f32 %v151, 0.01
    %v162 = vmul.f32 %v156, 0.01
    %v163 = vsel %vm159, %v151, %v161
    %v164 = vsel %vm160, %v156, %v162
    %v165 = vld [vmem:[%s2] sm:$0xff]
    %v166 = vld [vmem:[%s2 + $0x8] sm:$0xff]
    %v167 = vld [vmem:[%s2 + $0x10] sm:$0xff]
    %v168 = vld [vmem:[%s2 + $0x18] sm:$0xff]
    %v169 = vlaneseq
    %v170 = vshrl.u32 %v169, 7
    %v171 = vsub.s32 1, %v170
    %v172 = vrot.slane %v70, %v171
    %vm173 = vcmask 261120
    %v175 = vsel %vm173, %v163, 0
    %v178 = vsel %vm173, %v164, 0
    %180 = vmatprep.subr.mxu0 0.0
    %181 = vmatpush1.msra.mxu0 0.0
    %182 = vmatprep.subr.mxu0 0.0
    %183 = vmatpush1.msra.mxu0 0.0
    %184 = vmatprep.subr.mxu0 0.0
    %185 = vmatpush1.msra.mxu0 0.0
    %186 = vmatprep.subr.mxu0 0.0
    %187 = vmatpush1.msra.mxu0 0.0
    %188 = vmatprep.subr.mxu0 0.0
    %189 = vmatpush1.msra.mxu0 0.0
    %190 = vmatprep.subr.mxu0 0.0
    %191 = vmatpush1.msra.mxu0 0.0
    %192 = vmatprep.subr.mxu0 0.0
    %193 = vmatpush1.msra.mxu0 0.0
    %194 = vmatprep.subr.mxu0 0.0
    %195 = vmatpush1.msra.mxu0 0.0
    %196 = vmatprep.subr.mxu0 0.0
    %197 = vmatpush1.msra.mxu0 0.0
    %198 = vmatprep.subr.mxu0 0.0
    %199 = vmatpush1.msra.mxu0 0.0
    %200 = vmatprep.subr.mxu0 0.0
    %201 = vmatpush1.msra.mxu0 0.0
    %202 = vmatprep.subr.mxu0 0.0
    %203 = vmatpush1.msra.mxu0 0.0
    %204 = vmatprep.subr.mxu0 0.0
    %205 = vmatpush1.msra.mxu0 %v168
    %206 = vmatprep.subr.mxu0 0.0
    %207 = vmatpush1.msra.mxu0 %v167
    %208 = vmatprep.subr.mxu0 0.0
    %209 = vmatpush1.msra.mxu0 %v166
    %210 = vmatprep.subr.mxu0 0.0
    %211 = vmatpush1.msra.mxu0 %v165
    %212 = vmatprep.subr.mxu0 0.0
    %213 = vmatpush2.msra.mxu0 0.0
    %214 = vmatprep.subr.mxu0 0.0
    %215 = vmatpush2.msra.mxu0 0.0
    %216 = vmatprep.subr.mxu0 0.0
    %217 = vmatpush2.msra.mxu0 0.0
    %218 = vmatprep.subr.mxu0 0.0
    %219 = vmatpush2.msra.mxu0 0.0
    %220 = vmatprep.subr.mxu0 0.0
    %221 = vmatpush2.msra.mxu0 0.0
    %222 = vmatprep.subr.mxu0 0.0
    %223 = vmatpush2.msra.mxu0 0.0
    %224 = vmatprep.subr.mxu0 0.0
    %225 = vmatpush2.msra.mxu0 0.0
    %226 = vmatprep.subr.mxu0 0.0
    %227 = vmatpush2.msra.mxu0 0.0
    %228 = vmatprep.subr.mxu0 0.0
    %229 = vmatpush2.msra.mxu0 0.0
    %230 = vmatprep.subr.mxu0 0.0
    %231 = vmatpush2.msra.mxu0 0.0
    %232 = vmatprep.subr.mxu0 0.0
    %233 = vmatpush2.msra.mxu0 0.0
    %234 = vmatprep.subr.mxu0 0.0
    %235 = vmatpush2.msra.mxu0 0.0
    %236 = vmatprep.subr.mxu0 0.0
    %237 = vmatpush2.msra.mxu0 0.0
    %238 = vmatprep.subr.mxu0 0.0
    %239 = vmatpush2.msra.mxu0 0.0
    %240 = vmatprep.subr.mxu0 0.0
    %241 = vmatpush2.msra.mxu0 0.0
    %242 = vmatprep.subr.mxu0 0.0
    %243 = vmatpush2.msra.mxu0 0.0
    %244 = vmatprep.mubr.f32.mxu0 0.0
    %245 = vmatmul.mubr.f32.gmra.mxu0 %v175
    %v246 = vpop.f32.mrf.mxu0
    %v247 = vadd.f32 %v172, %v246
    %v248 = vpop.f32.mrf.mxu0
    %249 = vmatprep.mubr.f32.mxu0 0.0
    %250 = vmatmul.mubr.f32.gmra.mxu0 %v178
    %v251 = vpop.f32.mrf.mxu0
    %v252 = vadd.f32 %v172, %v251
    %v253 = vpop.f32.mrf.mxu0
    %254 = vdwg.mxu0
    %vm255 = vcmp.gt.f32.partialorder %v247, 0.0
    %vm256 = vcmp.gt.f32.partialorder %v252, 0.0
    %v257 = vmul.f32 %v247, 0.01
    %v258 = vmul.f32 %v252, 0.01
    %v259 = vsel %vm255, %v247, %v257
    %v260 = vsel %vm256, %v252, %v258
    %v261 = vld [vmem:[#allocation5] sm:$0xff]
    %v262 = vld [vmem:[#allocation5 + $0x8] sm:$0xff]
    %v263 = vlaneseq
    %v264 = vshrl.u32 %v263, 7
    %v265 = vsub.s32 2, %v264
    %v266 = vrot.slane %v70, %v265
    %v268 = vsel %vm77, %v259, 0
    %v271 = vsel %vm77, %v260, 0
    %273 = vmatprep.subr.mxu0 0.0
    %274 = vmatpush1.msra.mxu0 0.0
    %275 = vmatprep.subr.mxu0 0.0
    %276 = vmatpush1.msra.mxu0 0.0
    %277 = vmatprep.subr.mxu0 0.0
    %278 = vmatpush1.msra.mxu0 0.0
    %279 = vmatprep.subr.mxu0 0.0
    %280 = vmatpush1.msra.mxu0 0.0
    %281 = vmatprep.subr.mxu0 0.0
    %282 = vmatpush1.msra.mxu0 0.0
    %283 = vmatprep.subr.mxu0 0.0
    %284 = vmatpush1.msra.mxu0 0.0
    %285 = vmatprep.subr.mxu0 0.0
    %286 = vmatpush1.msra.mxu0 0.0
    %287 = vmatprep.subr.mxu0 0.0
    %288 = vmatpush1.msra.mxu0 0.0
    %289 = vmatprep.subr.mxu0 0.0
    %290 = vmatpush1.msra.mxu0 0.0
    %291 = vmatprep.subr.mxu0 0.0
    %292 = vmatpush1.msra.mxu0 0.0
    %293 = vmatprep.subr.mxu0 0.0
    %294 = vmatpush1.msra.mxu0 0.0
    %295 = vmatprep.subr.mxu0 0.0
    %296 = vmatpush1.msra.mxu0 0.0
    %297 = vmatprep.subr.mxu0 0.0
    %298 = vmatpush1.msra.mxu0 0.0
    %299 = vmatprep.subr.mxu0 0.0
    %300 = vmatpush1.msra.mxu0 0.0
    %301 = vmatprep.subr.mxu0 0.0
    %302 = vmatpush1.msra.mxu0 %v262
    %303 = vmatprep.subr.mxu0 0.0
    %304 = vmatpush1.msra.mxu0 %v261
    %305 = vmatprep.subr.mxu0 0.0
    %306 = vmatpush2.msra.mxu0 0.0
    %307 = vmatprep.subr.mxu0 0.0
    %308 = vmatpush2.msra.mxu0 0.0
    %309 = vmatprep.subr.mxu0 0.0
    %310 = vmatpush2.msra.mxu0 0.0
    %311 = vmatprep.subr.mxu0 0.0
    %312 = vmatpush2.msra.mxu0 0.0
    %313 = vmatprep.subr.mxu0 0.0
    %314 = vmatpush2.msra.mxu0 0.0
    %315 = vmatprep.subr.mxu0 0.0
    %316 = vmatpush2.msra.mxu0 0.0
    %317 = vmatprep.subr.mxu0 0.0
    %318 = vmatpush2.msra.mxu0 0.0
    %319 = vmatprep.subr.mxu0 0.0
    %320 = vmatpush2.msra.mxu0 0.0
    %321 = vmatprep.subr.mxu0 0.0
    %322 = vmatpush2.msra.mxu0 0.0
    %323 = vmatprep.subr.mxu0 0.0
    %324 = vmatpush2.msra.mxu0 0.0
    %325 = vmatprep.subr.mxu0 0.0
    %326 = vmatpush2.msra.mxu0 0.0
    %327 = vmatprep.subr.mxu0 0.0
    %328 = vmatpush2.msra.mxu0 0.0
    %329 = vmatprep.subr.mxu0 0.0
    %330 = vmatpush2.msra.mxu0 0.0
    %331 = vmatprep.subr.mxu0 0.0
    %332 = vmatpush2.msra.mxu0 0.0
    %333 = vmatprep.subr.mxu0 0.0
    %334 = vmatpush2.msra.mxu0 0.0
    %335 = vmatprep.subr.mxu0 0.0
    %336 = vmatpush2.msra.mxu0 0.0
    %337 = vmatprep.mubr.f32.mxu0 0.0
    %338 = vmatmul.mubr.f32.gmra.mxu0 %v268
    %v339 = vpop.f32.mrf.mxu0
    %v340 = vadd.f32 %v266, %v339
    %v341 = vpop.f32.mrf.mxu0
    %342 = vmatprep.mubr.f32.mxu0 0.0
    %343 = vmatmul.mubr.f32.gmra.mxu0 %v271
    %v344 = vpop.f32.mrf.mxu0
    %v345 = vadd.f32 %v266, %v344
    %v346 = vpop.f32.mrf.mxu0
    %347 = vdwg.mxu0
    %vm348 = vcmask 64512
    %v349 = vsel %vm348, %v340, -inf
    %350 = vmax.xlane.f32.xlu0 %v349
    %v351 = vpop.xlane.xlu0 %350
    %v352 = vsel %vm348, %v345, -inf
    %353 = vmax.xlane.f32.xlu0 %v352
    %v354 = vpop.xlane.xlu0 %353
    %v355 = vsub.f32 %v340, %v351
    %v356 = vsub.f32 %v345, %v354
    %vm357 = vcmask 130112
    %v358 = vsel %vm357, %v340, -inf
    %359 = vmax.xlane.f32.xlu0 %v358
    %v360 = vpop.xlane.xlu0 %359
    %v361 = vsel %vm357, %v345, -inf
    %362 = vmax.xlane.f32.xlu0 %v361
    %v363 = vpop.xlane.xlu0 %362
    %v364 = vsub.f32 %v340, %v360
    %v365 = vsub.f32 %v345, %v363
    %vm366 = vcmask 195712
    %v367 = vsel %vm366, %v340, -inf
    %368 = vmax.xlane.f32.xlu0 %v367
    %v369 = vpop.xlane.xlu0 %368
    %v370 = vsel %vm366, %v345, -inf
    %371 = vmax.xlane.f32.xlu0 %v370
    %v372 = vpop.xlane.xlu0 %371
    %v373 = vsub.f32 %v340, %v369
    %v374 = vsub.f32 %v345, %v372
    %vm375 = vcmask 261312
    %v376 = vsel %vm375, %v340, -inf
    %377 = vmax.xlane.f32.xlu0 %v376
    %v378 = vpop.xlane.xlu0 %377
    %v379 = vsel %vm375, %v345, -inf
    %380 = vmax.xlane.f32.xlu0 %v379
    %v381 = vpop.xlane.xlu0 %380
    %v382 = vsub.f32 %v340, %v378
    %v383 = vsub.f32 %v345, %v381
    %v384 = vsel %vm348, %v355, %v364
    %v385 = vsel %vm348, %v356, %v365
    %v386 = vsel %vm77, %v384, %v373
    %v387 = vsel %vm77, %v385, %v374
    %vm388 = vcmask 195584
    %v389 = vsel %vm388, %v386, %v382
    %v390 = vsel %vm388, %v387, %v383
    %v391 = vmul.f32 %v389, 1.442695
    %v392 = vpow.pop %v391
    %v393 = vmul.f32 %v390, 1.442695
    %v394 = vpow.pop %v393
    %v395 = vld [vmem:[#allocation7] sm:$0xff]
    %v396 = vld [vmem:[#allocation7 + $0x8] sm:$0xff]
    %v397 = vld [vmem:[#allocation7 + $0x10] sm:$0xff]
    %v398 = vld [vmem:[#allocation7 + $0x18] sm:$0xff]
    %v400 = vsel %vm173, %v392, 0
    %v403 = vsel %vm173, %v394, 0
    %405 = vmatprep.subr.mxu0 0.0
    %406 = vmatpush1.msra.mxu0 0.0
    %407 = vmatprep.subr.mxu0 0.0
    %408 = vmatpush1.msra.mxu0 0.0
    %409 = vmatprep.subr.mxu0 0.0
    %410 = vmatpush1.msra.mxu0 0.0
    %411 = vmatprep.subr.mxu0 0.0
    %412 = vmatpush1.msra.mxu0 0.0
    %413 = vmatprep.subr.mxu0 0.0
    %414 = vmatpush1.msra.mxu0 0.0
    %415 = vmatprep.subr.mxu0 0.0
    %416 = vmatpush1.msra.mxu0 0.0
    %417 = vmatprep.subr.mxu0 0.0
    %418 = vmatpush1.msra.mxu0 0.0
    %419 = vmatprep.subr.mxu0 0.0
    %420 = vmatpush1.msra.mxu0 0.0
    %421 = vmatprep.subr.mxu0 0.0
    %422 = vmatpush1.msra.mxu0 0.0
    %423 = vmatprep.subr.mxu0 0.0
    %424 = vmatpush1.msra.mxu0 0.0
    %425 = vmatprep.subr.mxu0 0.0
    %426 = vmatpush1.msra.mxu0 0.0
    %427 = vmatprep.subr.mxu0 0.0
    %428 = vmatpush1.msra.mxu0 0.0
    %429 = vmatprep.subr.mxu0 0.0
    %430 = vmatpush1.msra.mxu0 %v398
    %431 = vmatprep.subr.mxu0 0.0
    %432 = vmatpush1.msra.mxu0 %v397
    %433 = vmatprep.subr.mxu0 0.0
    %434 = vmatpush1.msra.mxu0 %v396
    %435 = vmatprep.subr.mxu0 0.0
    %436 = vmatpush1.msra.mxu0 %v395
    %437 = vmatprep.subr.mxu0 0.0
    %438 = vmatpush2.msra.mxu0 0.0
    %439 = vmatprep.subr.mxu0 0.0
    %440 = vmatpush2.msra.mxu0 0.0
    %441 = vmatprep.subr.mxu0 0.0
    %442 = vmatpush2.msra.mxu0 0.0
    %443 = vmatprep.subr.mxu0 0.0
    %444 = vmatpush2.msra.mxu0 0.0
    %445 = vmatprep.subr.mxu0 0.0
    %446 = vmatpush2.msra.mxu0 0.0
    %447 = vmatprep.subr.mxu0 0.0
    %448 = vmatpush2.msra.mxu0 0.0
    %449 = vmatprep.subr.mxu0 0.0
    %450 = vmatpush2.msra.mxu0 0.0
    %451 = vmatprep.subr.mxu0 0.0
    %452 = vmatpush2.msra.mxu0 0.0
    %453 = vmatprep.subr.mxu0 0.0
    %454 = vmatpush2.msra.mxu0 0.0
    %455 = vmatprep.subr.mxu0 0.0
    %456 = vmatpush2.msra.mxu0 0.0
    %457 = vmatprep.subr.mxu0 0.0
    %458 = vmatpush2.msra.mxu0 0.0
    %459 = vmatprep.subr.mxu0 0.0
    %460 = vmatpush2.msra.mxu0 0.0
    %461 = vmatprep.subr.mxu0 0.0
    %462 = vmatpush2.msra.mxu0 0.0
    %463 = vmatprep.subr.mxu0 0.0
    %464 = vmatpush2.msra.mxu0 0.0
    %465 = vmatprep.subr.mxu0 0.0
    %466 = vmatpush2.msra.mxu0 0.0
    %467 = vmatprep.subr.mxu0 0.0
    %468 = vmatpush2.msra.mxu0 0.0
    %469 = vmatprep.mubr.f32.mxu0 0.0
    %470 = vmatmul.mubr.f32.gmra.mxu0 %v400
    %v471 = vpop.f32.mrf.mxu0
    %v472 = vadd.f32 0.0, %v471
    %v473 = vpop.f32.mrf.mxu0
    %474 = vmatprep.mubr.f32.mxu0 0.0
    %475 = vmatmul.mubr.f32.gmra.mxu0 %v403
    %v476 = vpop.f32.mrf.mxu0
    %v477 = vadd.f32 0.0, %v476
    %v478 = vpop.f32.mrf.mxu0
    %479 = vdwg.mxu0
    %v480 = vrcp.pop %v472
    %v481 = vmul.f32 %v392, %v480
    %v482 = vrcp.pop %v477
    %v483 = vmul.f32 %v394, %v482
    %v484 = vld [vmem:[%s4] sm:$0xff]
    %v485 = vld [vmem:[%s4 + $0x8] sm:$0xff]
    %v486 = vld [vmem:[%s4 + $0x10] sm:$0xff]
    %v487 = vld [vmem:[%s4 + $0x18] sm:$0xff]
    %v488 = vlaneseq
    %v489 = vshrl.u32 %v488, 7
    %v490 = vsub.s32 3, %v489
    %v491 = vrot.slane %v70, %v490
    %v493 = vsel %vm173, %v481, 0
    %v496 = vsel %vm173, %v483, 0
    %498 = vmatprep.subr.mxu0 0.0
    %499 = vmatpush1.msra.mxu0 0.0
    %500 = vmatprep.subr.mxu0 0.0
    %501 = vmatpush1.msra.mxu0 0.0
    %502 = vmatprep.subr.mxu0 0.0
    %503 = vmatpush1.msra.mxu0 0.0
    %504 = vmatprep.subr.mxu0 0.0
    %505 = vmatpush1.msra.mxu0 0.0
    %506 = vmatprep.subr.mxu0 0.0
    %507 = vmatpush1.msra.mxu0 0.0
    %508 = vmatprep.subr.mxu0 0.0
    %509 = vmatpush1.msra.mxu0 0.0
    %510 = vmatprep.subr.mxu0 0.0
    %511 = vmatpush1.msra.mxu0 0.0
    %512 = vmatprep.subr.mxu0 0.0
    %513 = vmatpush1.msra.mxu0 0.0
    %514 = vmatprep.subr.mxu0 0.0
    %515 = vmatpush1.msra.mxu0 0.0
    %516 = vmatprep.subr.mxu0 0.0
    %517 = vmatpush1.msra.mxu0 0.0
    %518 = vmatprep.subr.mxu0 0.0
    %519 = vmatpush1.msra.mxu0 0.0
    %520 = vmatprep.subr.mxu0 0.0
    %521 = vmatpush1.msra.mxu0 0.0
    %522 = vmatprep.subr.mxu0 0.0
    %523 = vmatpush1.msra.mxu0 %v487
    %524 = vmatprep.subr.mxu0 0.0
    %525 = vmatpush1.msra.mxu0 %v486
    %526 = vmatprep.subr.mxu0 0.0
    %527 = vmatpush1.msra.mxu0 %v485
    %528 = vmatprep.subr.mxu0 0.0
    %529 = vmatpush1.msra.mxu0 %v484
    %530 = vmatprep.subr.mxu0 0.0
    %531 = vmatpush2.msra.mxu0 0.0
    %532 = vmatprep.subr.mxu0 0.0
    %533 = vmatpush2.msra.mxu0 0.0
    %534 = vmatprep.subr.mxu0 0.0
    %535 = vmatpush2.msra.mxu0 0.0
    %536 = vmatprep.subr.mxu0 0.0
    %537 = vmatpush2.msra.mxu0 0.0
    %538 = vmatprep.subr.mxu0 0.0
    %539 = vmatpush2.msra.mxu0 0.0
    %540 = vmatprep.subr.mxu0 0.0
    %541 = vmatpush2.msra.mxu0 0.0
    %542 = vmatprep.subr.mxu0 0.0
    %543 = vmatpush2.msra.mxu0 0.0
    %544 = vmatprep.subr.mxu0 0.0
    %545 = vmatpush2.msra.mxu0 0.0
    %546 = vmatprep.subr.mxu0 0.0
    %547 = vmatpush2.msra.mxu0 0.0
    %548 = vmatprep.subr.mxu0 0.0
    %549 = vmatpush2.msra.mxu0 0.0
    %550 = vmatprep.subr.mxu0 0.0
    %551 = vmatpush2.msra.mxu0 0.0
    %552 = vmatprep.subr.mxu0 0.0
    %553 = vmatpush2.msra.mxu0 0.0
    %554 = vmatprep.subr.mxu0 0.0
    %555 = vmatpush2.msra.mxu0 0.0
    %556 = vmatprep.subr.mxu0 0.0
    %557 = vmatpush2.msra.mxu0 0.0
    %558 = vmatprep.subr.mxu0 0.0
    %559 = vmatpush2.msra.mxu0 0.0
    %560 = vmatprep.subr.mxu0 0.0
    %561 = vmatpush2.msra.mxu0 0.0
    %562 = vmatprep.mubr.f32.mxu0 0.0
    %563 = vmatmul.mubr.f32.gmra.mxu0 %v493
    %v564 = vpop.f32.mrf.mxu0
    %v565 = vadd.f32 %v491, %v564
    %v566 = vpop.f32.mrf.mxu0
    %567 = vmatprep.mubr.f32.mxu0 0.0
    %568 = vmatmul.mubr.f32.gmra.mxu0 %v496
    %v569 = vpop.f32.mrf.mxu0
    %v570 = vadd.f32 %v491, %v569
    %v571 = vpop.f32.mrf.mxu0
    %572 = vdwg.mxu0
    %vm573 = vcmp.gt.f32.partialorder %v565, 0.0
    %vm574 = vcmp.gt.f32.partialorder %v570, 0.0
    %v575 = vmul.f32 %v565, 0.01
    %v576 = vmul.f32 %v570, 0.01
    %v577 = vsel %vm573, %v565, %v575
    %v578 = vsel %vm574, %v570, %v576
    %581 = vrot.lane.b32.xlu0 %v577, 16
    %v582 = vpop.permute.xlu0 %581
    %583 = vrot.lane.b32.xlu0 %v578, 16
    %v584 = vpop.permute.xlu0 %583
    %v587 = vadd.f32 %v259, %v582
    %v588 = vadd.f32 %v260, %v584
    %v589 = vmax.f32 %v587, 0.0
    %v590 = vmax.f32 %v588, 0.0
    %v591 = vlaneseq
    %v592 = vshrl.u32 %v591, 7
    %v593 = vsub.s32 4, %v592
    %v594 = vrot.slane %v70, %v593
    %596 = vrot.lane.b32.xlu0 %v594, 16
    %v597 = vpop.permute.xlu0 %596
    %v599 = vmul.f32 %v589, %v597
    %v600 = vmul.f32 %v590, %v597
    %603 = vrot.lane.b32.xlu0 %v599, 112
    %v604 = vpop.permute.xlu0 %603
    %605 = vrot.lane.b32.xlu0 %v600, 112
    %v606 = vpop.permute.xlu0 %605
    %v609 = vsel %vm77, %v604, 0.0
    %610 = vadd.xlane.f32.xlu0 %v609
    %v611 = vpop.xlane.xlu0 %610
    %v612 = vsel %vm77, %v606, 0.0
    %613 = vadd.xlane.f32.xlu0 %v612
    %v614 = vpop.xlane.xlu0 %613
    %v615 = vlaneseq
    %v616 = vshrl.u32 %v615, 7
    %v617 = vsub.s32 5, %v616
    %v618 = vrot.slane %v70, %v617
    %v619 = vadd.f32 %v611, %v618
    %v620 = vadd.f32 %v614, %v618
    %623 = vrot.lane.b32.xlu0 %v619, 32
    %v624 = vpop.permute.xlu0 %623
    %625 = vrot.lane.b32.xlu0 %v620, 32
    %v626 = vpop.permute.xlu0 %625
    %v629 = vsel %vm173, %v481, %v624
    %v630 = vsel %vm173, %v483, %v626
    %vm631 = vcmask 269312
    %v632 = vsel %vm631, %v629, 0.0
    %v633 = vsel %vm631, %v630, 0.0
    %634 = vst [vmem:[#allocation8] sm:$0xff] %v632
    %635 = vst [vmem:[#allocation8 + $0x8] sm:$0xff] %v633
    // Predicated region
    $region42: #{tpu_custom_call.1} parent=1 // pred_check
      _
    $region43: #{tpu_custom_call.1} parent=1 // pred_check_branch
      %637 = sbr.rel (0) target = $region45
    $region44: #{tpu_custom_call.1} parent=1 // pred_region
      %s639 = ssub.s32 256, 256
      %640 = vsyncadd [#allocation4], %s639
      %s641 = sshll.u32 [#allocation8], 4
      %s642 = int_to_ptr.vmem [resolvable:$true] %s641
      %647 = dma.vmem_to_hbm [thread:$0]  %s642, 256, %s7, [#allocation4], 128, 128, 8
    $region45: #{tpu_custom_call.1} parent=1 // pred_fallthru
      _
    // Predicated region
    $region46: #{tpu_custom_call.1} parent=1 // pred_check
      _
    $region47: #{tpu_custom_call.1} parent=1 // pred_check_branch
      %649 = sbr.rel (0) target = $region49
    $region48: #{tpu_custom_call.1} parent=1 // pred_region
      %650 = dma.done [#allocation4], 256
    $region49: #{tpu_custom_call.1} parent=1 // pred_fallthru
      _
    %651 = vsyncpa [#allocation3], 1
    %652 = vsyncpa [#allocation6], 1
    %653 = vsyncpa [#allocation4], 1

</llo_original>
